<compile_context>
chip_gen: v5e
topology: v5e:2x2
jax: 0.10.0
libtpu: 0.0.40
codegen_flags: <defaults>
</compile_context>

<pallas_src>
import numpy as np

import jax
import jax.numpy as jnp
from jax.experimental import pallas as pl
from jax.experimental.pallas import tpu as pltpu


# ---------------------------------------------------------------------------
# Fused Pallas kernel:
#   conv(as Toeplitz matmul)+ReLU -> cls1+ReLU -> cls2 -> softmax
# Operands (all whole-array VMEM resident, 4 input DMAs total):
#   x_ref  : (B, C*L)        flattened input windows
#   w_ref  : (C*L + H, H)    [conv Toeplitz (C*L, H) ; padded cls1 (H, H)]
#   b_ref  : (8, H)          row 0 conv bias, row 1 cls1 bias, row 2 cls2 bias
#   w2_ref : (H, n_cls)      padded cls2 weight
#   o_ref  : (B, n_cls)      softmax probabilities
# where H = 256 (192 hidden features zero-padded to a lane-dense width).
# ---------------------------------------------------------------------------

def _fused_forward_kernel(x_ref, w_ref, b_ref, w2_ref, o_ref):
    cl = x_ref.shape[1]        # C*L (static)
    n_cls = o_ref.shape[1]     # number of classes (static)

    # Conv1d + ReLU.  w_ref[0:cl] is the Toeplitz-folded conv matrix whose
    # column order already matches PyTorch's channel-major flatten
    # (oc * L_out + t); padded columns are exactly zero.
    emb = jnp.dot(x_ref[...], w_ref[0:cl, :],
                  preferred_element_type=jnp.float32) + b_ref[0:1, :]
    emb = jnp.maximum(emb, 0.0)                                   # (B, 256)

    # cls1 + ReLU (padded rows/cols of the weight are zero -> exact).
    h = jnp.dot(emb, w_ref[cl:, :],
                preferred_element_type=jnp.float32) + b_ref[1:2, :]
    h = jnp.maximum(h, 0.0)                                       # (B, 256)

    # cls2 + softmax over classes (dim=1).  Exact division: the EUP/VPU have
    # plenty of slack in this latency-bound kernel, so approx reciprocal
    # would buy nothing and cost normalization accuracy.
    logits = jnp.dot(h, w2_ref[...],
                     preferred_element_type=jnp.float32) + b_ref[2:3, 0:n_cls]
    m = jnp.max(logits, axis=-1, keepdims=True)
    e = jnp.exp(logits - m)
    o_ref[...] = e / jnp.sum(e, axis=-1, keepdims=True)           # (B, 12)


# ---------------------------------------------------------------------------
# Parameter prep (one-time, host side):
#   * fold im2col + channel-major flatten into a Toeplitz conv matrix
#   * zero-pad the 192-wide hidden dims to 256 (lane-dense, numerically exact)
#   * pack conv+cls1 weights into one slab and all biases into one buffer
# ---------------------------------------------------------------------------

def prepare_params(params, L):
    """Build packed, padded kernel operands from raw parameters.

    conv_w_big[c*L + l, oc*L_out + t] = conv_w[oc, c, l - t] for 0 <= l-t < K,
    so that  (x.reshape(B, C*L) @ conv_w_big)[b, oc*L_out + t]
           =  sum_{c,k} x[b, c, t+k] * conv_w[oc, c, k]   (valid conv, stride 1)
    and the columns are already in PyTorch's channel-major flatten order.

    `cls1_w` / `cls2_w` must be supplied in (in, out) layout for `x @ W`.
    When importing trained PyTorch nn.Linear weights ((out, in)), pass
    `weight.T` here.
    """
    conv_w = np.asarray(params["conv_w"], dtype=np.float32)       # (OC, C, K)
    conv_b = np.asarray(params["conv_b"], dtype=np.float32)       # (OC,)
    cls1_w = np.asarray(params["cls1_w"], dtype=np.float32)       # (192, 192)
    cls1_b = np.asarray(params["cls1_b"], dtype=np.float32)       # (192,)
    cls2_w = np.asarray(params["cls2_w"], dtype=np.float32)       # (192, 12)
    cls2_b = np.asarray(params["cls2_b"], dtype=np.float32)       # (12,)

    OC, C, K = conv_w.shape
    L_out = L - K + 1
    hidden = OC * L_out                                           # 192
    n_cls = cls2_w.shape[1]                                       # 12
    H = ((hidden + 127) // 128) * 128                             # 256 (lane-dense)

    # Toeplitz conv matrix, padded to H columns.
    W = np.zeros((C * L, H), dtype=np.float32)
    t_idx = np.arange(L_out)
    cols = np.arange(OC)[:, None] * L_out + t_idx[None, :]        # (OC, L_out)
    for c in range(C):
        for k in range(K):
            rows = c * L + k + t_idx                              # (L_out,)
            W[rows[None, :], cols] = conv_w[:, c, k][:, None]

    # cls1 weight padded to (H, H); padded rows/cols are zero (exact).
    W1 = np.zeros((H, H), dtype=np.float32)
    W1[:hidden, :hidden] = cls1_w

    # One weight slab: [conv Toeplitz ; cls1] -> (C*L + H, H).
    w_slab = np.concatenate([W, W1], axis=0)                      # (320, 256)

    # cls2 weight padded on the input dim to (H, n_cls).
    W2 = np.zeros((H, n_cls), dtype=np.float32)
    W2[:hidden, :] = cls2_w

    # Bias slab (8, H): row 0 conv bias (repeated per output position),
    # row 1 cls1 bias, row 2 cls2 bias (first n_cls lanes); rest zero.
    b_slab = np.zeros((8, H), dtype=np.float32)
    b_slab[0, :hidden] = np.repeat(conv_b, L_out)
    b_slab[1, :hidden] = cls1_b
    b_slab[2, :n_cls] = cls2_b

    return {
        "w_slab": jnp.asarray(w_slab),     # (C*L + H, H)
        "b_slab": jnp.asarray(b_slab),     # (8, H)
        "cls2_w": jnp.asarray(W2),         # (H, n_cls)
        "n_cls": n_cls,
        "cl": C * L,
    }


# ---------------------------------------------------------------------------
# Forward wrapper (single pallas_call, whole-array VMEM specs, no grid)
# ---------------------------------------------------------------------------

def atomic_har_forward(x, prep):
    """x: (B, C, L) float32.  Returns {'class': (B, 12) probs, 'emb': 0}."""
    B = x.shape[0]
    cl = prep["cl"]
    n_cls = prep["n_cls"]

    x_flat = x.reshape(B, cl).astype(jnp.float32)   # contiguous view, free

    vmem = pl.BlockSpec(memory_space=pltpu.MemorySpace.VMEM)
    probs = pl.pallas_call(
        _fused_forward_kernel,
        out_shape=jax.ShapeDtypeStruct((B, n_cls), jnp.float32),
        in_specs=[vmem] * 4,
        out_specs=vmem,
    )(x_flat, prep["w_slab"], prep["b_slab"], prep["cls2_w"])

    return {"class": probs, "emb": 0}


# ---------------------------------------------------------------------------
# Plain-JAX reference (for correctness check) and deterministic init
# ---------------------------------------------------------------------------

def reference_forward(x, params):
    OC, C, K = params["conv_w"].shape
    B, _, L = x.shape
    L_out = L - K + 1
    cols = jnp.stack([x[:, :, k:k + L_out] for k in range(K)], axis=-1)   # (B,C,Lout,K)
    conv = jnp.einsum("bctk,ock->bot", cols, params["conv_w"])            # (B,OC,Lout)
    conv = jnp.maximum(conv + params["conv_b"][None, :, None], 0.0)
    flat = conv.reshape(B, -1)                                            # channel-major
    h = jnp.maximum(flat @ params["cls1_w"] + params["cls1_b"], 0.0)
    logits = h @ params["cls2_w"] + params["cls2_b"]
    return jax.nn.softmax(logits, axis=-1)


def init_params(key, in_ch=4, out_ch=16, kernel=5):
    ks = jax.random.split(key, 6)
    scale = 0.05
    return {
        # Conv1d(in_ch, out_ch, kernel)
        "conv_w": scale * jax.random.normal(ks[0], (out_ch, in_ch, kernel), jnp.float32),
        "conv_b": scale * jax.random.normal(ks[1], (out_ch,), jnp.float32),
        # cls1: Linear(192, 192)  (stored as (in, out) for x @ W)
        "cls1_w": scale * jax.random.normal(ks[2], (192, 192), jnp.float32),
        "cls1_b": scale * jax.random.normal(ks[3], (192,), jnp.float32),
        # cls2: Linear(192, 12)
        "cls2_w": scale * jax.random.normal(ks[4], (192, 12), jnp.float32),
        "cls2_b": scale * jax.random.normal(ks[5], (12,), jnp.float32),
    }


if __name__ == "__main__":
    key = jax.random.PRNGKey(0)
    k_x, k_p = jax.random.split(key)

    # Shapes implied by the module: B=2, C=4 IMU channels, L=16 samples
    # -> conv (k=5, stride=1) gives L_out=12, OC=16 -> 192-dim flat embedding.
    x = jax.random.normal(k_x, (2, 4, 16), jnp.float32)
    params = init_params(k_p)
    prep = prepare_params(params, L=x.shape[2])

    out = atomic_har_forward(x, prep)
    probs = jax.block_until_ready(out["class"])

    ref = reference_forward(x, params)

    assert probs.shape == (2, 12)
    assert bool(jnp.all(jnp.isfinite(probs)))
    # Exact-division softmax: rows sum to 1 to f32 precision.
    assert bool(jnp.allclose(jnp.sum(probs, axis=1), 1.0, atol=1e-6))
    assert bool(jnp.allclose(probs, ref, atol=1e-5))

    print("KERNEL_OK")
</pallas_src>

<mosaic_0001>
module attributes {stable_mosaic.version = 11 : i64} {
  func.func @_fused_forward_kernel(%arg0: memref<2x64xf32, #tpu.memory_space<vmem>>, %arg1: memref<320x256xf32, #tpu.memory_space<vmem>>, %arg2: memref<8x256xf32, #tpu.memory_space<vmem>>, %arg3: memref<256x12xf32, #tpu.memory_space<vmem>>, %arg4: memref<2x12xf32, #tpu.memory_space<vmem>>) attributes {dimension_semantics = [], scalar_prefetch = 0 : i64, scratch_operands = 0 : i64, tpu.core_type = #tpu.core_type<tc>} {
    %c0 = arith.constant 0 : index
    %c0_0 = arith.constant 0 : index
    %0 = vector.load %arg0[%c0, %c0_0] : memref<2x64xf32, #tpu.memory_space<vmem>>, vector<2x64xf32>
    %c0_1 = arith.constant 0 : index
    %c0_2 = arith.constant 0 : index
    %1 = vector.load %arg1[%c0_1, %c0_2] : memref<320x256xf32, #tpu.memory_space<vmem>>, vector<64x256xf32>
    %cst = arith.constant dense<0.000000e+00> : vector<2x256xf32>
    %2 = tpu.matmul %0, %1, %cst {dimension_numbers = #tpu.dot_dimension_numbers<[1], [0], [0], [1], [0, 0, 1, 1], [], []>} : vector<2x64xf32>, vector<64x256xf32>, vector<2x256xf32> -> vector<2x256xf32>
    %c0_3 = arith.constant 0 : index
    %c0_4 = arith.constant 0 : index
    %3 = vector.load %arg2[%c0_3, %c0_4] : memref<8x256xf32, #tpu.memory_space<vmem>>, vector<1x256xf32>
    %4 = vector.broadcast %3 : vector<1x256xf32> to vector<2x256xf32>
    %5 = arith.addf %2, %4 : vector<2x256xf32>
    %cst_5 = arith.constant 0.000000e+00 : f32
    %6 = vector.broadcast %cst_5 : f32 to vector<2x256xf32>
    %7 = arith.maximumf %5, %6 : vector<2x256xf32>
    %c64 = arith.constant 64 : index
    %c0_6 = arith.constant 0 : index
    %8 = vector.load %arg1[%c64, %c0_6] : memref<320x256xf32, #tpu.memory_space<vmem>>, vector<256x256xf32>
    %cst_7 = arith.constant dense<0.000000e+00> : vector<2x256xf32>
    %9 = tpu.matmul %7, %8, %cst_7 {dimension_numbers = #tpu.dot_dimension_numbers<[1], [0], [0], [1], [0, 0, 1, 1], [], []>} : vector<2x256xf32>, vector<256x256xf32>, vector<2x256xf32> -> vector<2x256xf32>
    %c1 = arith.constant 1 : index
    %c0_8 = arith.constant 0 : index
    %10 = vector.load %arg2[%c1, %c0_8] : memref<8x256xf32, #tpu.memory_space<vmem>>, vector<1x256xf32>
    %11 = vector.broadcast %10 : vector<1x256xf32> to vector<2x256xf32>
    %12 = arith.addf %9, %11 : vector<2x256xf32>
    %cst_9 = arith.constant 0.000000e+00 : f32
    %13 = vector.broadcast %cst_9 : f32 to vector<2x256xf32>
    %14 = arith.maximumf %12, %13 : vector<2x256xf32>
    %c0_10 = arith.constant 0 : index
    %c0_11 = arith.constant 0 : index
    %15 = vector.load %arg3[%c0_10, %c0_11] : memref<256x12xf32, #tpu.memory_space<vmem>>, vector<256x12xf32>
    %cst_12 = arith.constant dense<0.000000e+00> : vector<2x12xf32>
    %16 = tpu.matmul %14, %15, %cst_12 {dimension_numbers = #tpu.dot_dimension_numbers<[1], [0], [0], [1], [0, 0, 1, 1], [], []>} : vector<2x256xf32>, vector<256x12xf32>, vector<2x12xf32> -> vector<2x12xf32>
    %c2 = arith.constant 2 : index
    %c0_13 = arith.constant 0 : index
    %17 = vector.load %arg2[%c2, %c0_13] : memref<8x256xf32, #tpu.memory_space<vmem>>, vector<1x12xf32>
    %18 = vector.broadcast %17 : vector<1x12xf32> to vector<2x12xf32>
    %19 = arith.addf %16, %18 : vector<2x12xf32>
    %cst_14 = arith.constant dense<0xFF800000> : vector<2xf32>
    %20 = vector.multi_reduction <maximumf>, %19, %cst_14 [1] : vector<2x12xf32> to vector<2xf32>
    %21 = vector.shape_cast %20 : vector<2xf32> to vector<2x1xf32>
    %22 = vector.broadcast %21 : vector<2x1xf32> to vector<2x12xf32>
    %23 = arith.subf %19, %22 : vector<2x12xf32>
    %24 = math.exp %23 : vector<2x12xf32>
    %cst_15 = arith.constant dense<0.000000e+00> : vector<2xf32>
    %25 = vector.multi_reduction <add>, %24, %cst_15 [1] : vector<2x12xf32> to vector<2xf32>
    %26 = vector.shape_cast %25 : vector<2xf32> to vector<2x1xf32>
    %27 = vector.broadcast %26 : vector<2x1xf32> to vector<2x12xf32>
    %28 = arith.divf %24, %27 : vector<2x12xf32>
    %c0_16 = arith.constant 0 : index
    %c0_17 = arith.constant 0 : index
    %29 = vector.load %arg4[%c0_16, %c0_17] : memref<2x12xf32, #tpu.memory_space<vmem>>, vector<2x12xf32>
    tpu.vector_store %arg4[%c0_16, %c0_17], %28 {strides = array<i32>} : memref<2x12xf32, #tpu.memory_space<vmem>>, vector<2x12xf32>,
    return
  }
}

</mosaic_0001>

<llo_original>
// kernel: tpu_custom_call.1
$region0: #{tpu_custom_call.1}
  #allocation0 [shape = 'u32[]', space=smem, size = 0x4, offset = 0x4, fixed_abs, tag = 'smem constant byte address 0x4 - core index']
  #allocation1 [shape = 'u32[72,128]{1,0:T(1,128)}', space=vmem, size = 0x9000, scoped, tag = 'internal scratch']
  %s0 = inlined_call_operand.vmem [shape: f32[2,64], index: 0, kind: input, shape index: {}]
  %s1 = inlined_call_operand.hbm [shape: f32[320,256], index: 1, kind: input, shape index: {}]
  %s2 = inlined_call_operand.vmem [shape: f32[8,256], index: 2, kind: input, shape index: {}]
  %s3 = inlined_call_operand.vmem [shape: f32[256,12], index: 3, kind: input, shape index: {}]
  %s4 = inlined_call_operand.hbm [shape: f32[2,12], index: 4, kind: output, shape index: {}]
  %s5 = sld [smem:[#allocation0]]
  $region30: #{tpu_custom_call.1} parent=0
    _
  %s7 = ssub.s32 1, %s5
  %s8 = scalar_select 0, %s7, %s5
  $region1: #{tpu_custom_call.1} parent=0
    #allocation2 [shape = 'u8[327680]{0}', space=vmem, size = 0x50000, scoped, tag = 'input window, operand 1, single buffered']
    #allocation3 [shape = 's32[1]{0}', space=sflag, size = 0x4, scoped, tag = 'scoped memory for tpu_custom_call.1']
    #allocation4 [shape = 's32[1]{0}', space=sflag, size = 0x4, scoped, tag = 'scoped memory for tpu_custom_call.1']
    #allocation5 [shape = 'u8[1024]{0}', space=vmem, size = 0x400, scoped, tag = 'output window, operand 0, single buffered']
    %9 = vsyncpa [#allocation3], 0
    %10 = vsyncpa [#allocation4], 0
    // Predicated region
    $region2: #{tpu_custom_call.1} parent=1 // pred_check
      _
    $region3: #{tpu_custom_call.1} parent=1 // pred_check_branch
      %12 = sbr.rel (0) target = $region5
    $region4: #{tpu_custom_call.1} parent=1 // pred_region
      _
    $region5: #{tpu_custom_call.1} parent=1 // pred_fallthru
      _
    // Predicated region
    $region6: #{tpu_custom_call.1} parent=1 // pred_check
      _
    $region7: #{tpu_custom_call.1} parent=1 // pred_check_branch
      %14 = sbr.rel (0) target = $region9
    $region8: #{tpu_custom_call.1} parent=1 // pred_region
      %16 = vsyncadd [#allocation3], 0
      %s17 = sshll.u32 %s1, 4
      %s18 = int_to_ptr.hbm [resolvable:$true] %s17
      %s19 = sshll.u32 [#allocation2], 4
      %s20 = int_to_ptr.vmem [resolvable:$true] %s19
      %25 = dma.hbm_to_vmem [thread:$0]  %s18, 10240, %s20, [#allocation3], 256, 256, 16
    $region9: #{tpu_custom_call.1} parent=1 // pred_fallthru
      _
    // Predicated region
    $region10: #{tpu_custom_call.1} parent=1 // pred_check
      _
    $region11: #{tpu_custom_call.1} parent=1 // pred_check_branch
      %27 = sbr.rel (0) target = $region13
    $region12: #{tpu_custom_call.1} parent=1 // pred_region
      _
    $region13: #{tpu_custom_call.1} parent=1 // pred_fallthru
      _
    // Predicated region
    $region14: #{tpu_custom_call.1} parent=1 // pred_check
      _
    $region15: #{tpu_custom_call.1} parent=1 // pred_check_branch
      %29 = sbr.rel (0) target = $region17
    $region16: #{tpu_custom_call.1} parent=1 // pred_region
      _
    $region17: #{tpu_custom_call.1} parent=1 // pred_fallthru
      _
    // Predicated region
    $region18: #{tpu_custom_call.1} parent=1 // pred_check
      _
    $region19: #{tpu_custom_call.1} parent=1 // pred_check_branch
      %31 = sbr.rel (0) target = $region21
    $region20: #{tpu_custom_call.1} parent=1 // pred_region
      %33 = dma.done [#allocation3], 10240
    $region21: #{tpu_custom_call.1} parent=1 // pred_fallthru
      _
    %v34 = vld [vmem:[%s0] sm:$0x3]
    %v35 = vld [vmem:[#allocation2] sm:$0xff]
    %v36 = vld [vmem:[#allocation2 + $0x8] sm:$0xff]
    %v37 = vld [vmem:[#allocation2 + $0x10] sm:$0xff]
    %v38 = vld [vmem:[#allocation2 + $0x18] sm:$0xff]
    %v39 = vld [vmem:[#allocation2 + $0x20] sm:$0xff]
    %v40 = vld [vmem:[#allocation2 + $0x28] sm:$0xff]
    %v41 = vld [vmem:[#allocation2 + $0x30] sm:$0xff]
    %v42 = vld [vmem:[#allocation2 + $0x38] sm:$0xff]
    %v43 = vld [vmem:[#allocation2 + $0x40] sm:$0xff]
    %v44 = vld [vmem:[#allocation2 + $0x48] sm:$0xff]
    %v45 = vld [vmem:[#allocation2 + $0x50] sm:$0xff]
    %v46 = vld [vmem:[#allocation2 + $0x58] sm:$0xff]
    %v47 = vld [vmem:[#allocation2 + $0x60] sm:$0xff]
    %v48 = vld [vmem:[#allocation2 + $0x68] sm:$0xff]
    %v49 = vld [vmem:[#allocation2 + $0x70] sm:$0xff]
    %v50 = vld [vmem:[#allocation2 + $0x78] sm:$0xff]
    %v51 = vld [vmem:[%s2] ss:$8 sm:$0x3]
    %v53 = vperm.slane %v51, 0
    %v54 = vperm.slane %v51, 1
    %vm57 = vcmask 523264
    %v59 = vsel %vm57, %v34, 0
    %61 = vmatpush.msra.mxu0 0.0
    %62 = vmatpush.msra.mxu0 0.0
    %63 = vmatpush.msra.mxu0 0.0
    %64 = vmatpush.msra.mxu0 0.0
    %65 = vmatpush.msra.mxu0 0.0
    %66 = vmatpush.msra.mxu0 0.0
    %67 = vmatpush.msra.mxu0 0.0
    %68 = vmatpush.msra.mxu0 0.0
    %69 = vmatpush.msra.mxu0 %v49
    %70 = vmatpush.msra.mxu0 %v47
    %71 = vmatpush.msra.mxu0 %v45
    %72 = vmatpush.msra.mxu0 %v43
    %73 = vmatpush.msra.mxu0 %v41
    %74 = vmatpush.msra.mxu0 %v39
    %75 = vmatpush.msra.mxu0 %v37
    %76 = vmatpush.msra.mxu0 %v35
    %77 = vmatmul.f32.gmra.mxu0 %v59
    %v78 = vpop.f32.mrf.mxu0
    %v79 = vadd.f32 %v53, %v78
    %80 = vdwg.mxu0
    %81 = vmatpush.msra.mxu0 0.0
    %82 = vmatpush.msra.mxu0 0.0
    %83 = vmatpush.msra.mxu0 0.0
    %84 = vmatpush.msra.mxu0 0.0
    %85 = vmatpush.msra.mxu0 0.0
    %86 = vmatpush.msra.mxu0 0.0
    %87 = vmatpush.msra.mxu0 0.0
    %88 = vmatpush.msra.mxu0 0.0
    %89 = vmatpush.msra.mxu0 %v50
    %90 = vmatpush.msra.mxu0 %v48
    %91 = vmatpush.msra.mxu0 %v46
    %92 = vmatpush.msra.mxu0 %v44
    %93 = vmatpush.msra.mxu0 %v42
    %94 = vmatpush.msra.mxu0 %v40
    %95 = vmatpush.msra.mxu0 %v38
    %96 = vmatpush.msra.mxu0 %v36
    %97 = vmatmul.f32.gmra.mxu0 %v59
    %v98 = vpop.f32.mrf.mxu0
    %v99 = vadd.f32 %v54, %v98
    %100 = vdwg.mxu0
    %v101 = vmax.f32 %v79, 0.0
    %v102 = vmax.f32 %v99, 0.0
    %v103 = vld [vmem:[#allocation2 + $0x80] sm:$0xff]
    %v104 = vld [vmem:[#allocation2 + $0x88] sm:$0xff]
    %v105 = vld [vmem:[#allocation2 + $0x90] sm:$0xff]
    %v106 = vld [vmem:[#allocation2 + $0x98] sm:$0xff]
    %v107 = vld [vmem:[#allocation2 + $0xa0] sm:$0xff]
    %v108 = vld [vmem:[#allocation2 + $0xa8] sm:$0xff]
    %v109 = vld [vmem:[#allocation2 + $0xb0] sm:$0xff]
    %v110 = vld [vmem:[#allocation2 + $0xb8] sm:$0xff]
    %v111 = vld [vmem:[#allocation2 + $0xc0] sm:$0xff]
    %v112 = vld [vmem:[#allocation2 + $0xc8] sm:$0xff]
    %v113 = vld [vmem:[#allocation2 + $0xd0] sm:$0xff]
    %v114 = vld [vmem:[#allocation2 + $0xd8] sm:$0xff]
    %v115 = vld [vmem:[#allocation2 + $0xe0] sm:$0xff]
    %v116 = vld [vmem:[#allocation2 + $0xe8] sm:$0xff]
    %v117 = vld [vmem:[#allocation2 + $0xf0] sm:$0xff]
    %v118 = vld [vmem:[#allocation2 + $0xf8] sm:$0xff]
    %v119 = vld [vmem:[#allocation2 + $0x100] sm:$0xff]
    %v120 = vld [vmem:[#allocation2 + $0x108] sm:$0xff]
    %v121 = vld [vmem:[#allocation2 + $0x110] sm:$0xff]
    %v122 = vld [vmem:[#allocation2 + $0x118] sm:$0xff]
    %v123 = vld [vmem:[#allocation2 + $0x120] sm:$0xff]
    %v124 = vld [vmem:[#allocation2 + $0x128] sm:$0xff]
    %v125 = vld [vmem:[#allocation2 + $0x130] sm:$0xff]
    %v126 = vld [vmem:[#allocation2 + $0x138] sm:$0xff]
    %v127 = vld [vmem:[#allocation2 + $0x140] sm:$0xff]
    %v128 = vld [vmem:[#allocation2 + $0x148] sm:$0xff]
    %v129 = vld [vmem:[#allocation2 + $0x150] sm:$0xff]
    %v130 = vld [vmem:[#allocation2 + $0x158] sm:$0xff]
    %v131 = vld [vmem:[#allocation2 + $0x160] sm:$0xff]
    %v132 = vld [vmem:[#allocation2 + $0x168] sm:$0xff]
    %v133 = vld [vmem:[#allocation2 + $0x170] sm:$0xff]
    %v134 = vld [vmem:[#allocation2 + $0x178] sm:$0xff]
    %v135 = vld [vmem:[#allocation2 + $0x180] sm:$0xff]
    %v136 = vld [vmem:[#allocation2 + $0x188] sm:$0xff]
    %v137 = vld [vmem:[#allocation2 + $0x190] sm:$0xff]
    %v138 = vld [vmem:[#allocation2 + $0x198] sm:$0xff]
    %v139 = vld [vmem:[#allocation2 + $0x1a0] sm:$0xff]
    %v140 = vld [vmem:[#allocation2 + $0x1a8] sm:$0xff]
    %v141 = vld [vmem:[#allocation2 + $0x1b0] sm:$0xff]
    %v142 = vld [vmem:[#allocation2 + $0x1b8] sm:$0xff]
    %v143 = vld [vmem:[#allocation2 + $0x1c0] sm:$0xff]
    %v144 = vld [vmem:[#allocation2 + $0x1c8] sm:$0xff]
    %v145 = vld [vmem:[#allocation2 + $0x1d0] sm:$0xff]
    %v146 = vld [vmem:[#allocation2 + $0x1d8] sm:$0xff]
    %v147 = vld [vmem:[#allocation2 + $0x1e0] sm:$0xff]
    %v148 = vld [vmem:[#allocation2 + $0x1e8] sm:$0xff]
    %v149 = vld [vmem:[#allocation2 + $0x1f0] sm:$0xff]
    %v150 = vld [vmem:[#allocation2 + $0x1f8] sm:$0xff]
    %v151 = vld [vmem:[#allocation2 + $0x200] sm:$0xff]
    %v152 = vld [vmem:[#allocation2 + $0x208] sm:$0xff]
    %v153 = vld [vmem:[#allocation2 + $0x210] sm:$0xff]
    %v154 = vld [vmem:[#allocation2 + $0x218] sm:$0xff]
    %v155 = vld [vmem:[#allocation2 + $0x220] sm:$0xff]
    %v156 = vld [vmem:[#allocation2 + $0x228] sm:$0xff]
    %v157 = vld [vmem:[#allocation2 + $0x230] sm:$0xff]
    %v158 = vld [vmem:[#allocation2 + $0x238] sm:$0xff]
    %v159 = vld [vmem:[#allocation2 + $0x240] sm:$0xff]
    %v160 = vld [vmem:[#allocation2 + $0x248] sm:$0xff]
    %v161 = vld [vmem:[#allocation2 + $0x250] sm:$0xff]
    %v162 = vld [vmem:[#allocation2 + $0x258] sm:$0xff]
    %v163 = vld [vmem:[#allocation2 + $0x260] sm:$0xff]
    %v164 = vld [vmem:[#allocation2 + $0x268] sm:$0xff]
    %v165 = vld [vmem:[#allocation2 + $0x270] sm:$0xff]
    %v166 = vld [vmem:[#allocation2 + $0x278] sm:$0xff]
    %s167 = scalar_lea.vmem %s2, 1
    %v168 = vld [vmem:[%s167] ss:$8 sm:$0x3]
    %v170 = vperm.slane %v168, 0
    %v171 = vperm.slane %v168, 1
    %174 = vmatpush.msra.mxu0 %v133
    %175 = vmatpush.msra.mxu0 %v131
    %176 = vmatpush.msra.mxu0 %v129
    %177 = vmatpush.msra.mxu0 %v127
    %178 = vmatpush.msra.mxu0 %v125
    %179 = vmatpush.msra.mxu0 %v123
    %180 = vmatpush.msra.mxu0 %v121
    %181 = vmatpush.msra.mxu0 %v119
    %182 = vmatpush.msra.mxu0 %v117
    %183 = vmatpush.msra.mxu0 %v115
    %184 = vmatpush.msra.mxu0 %v113
    %185 = vmatpush.msra.mxu0 %v111
    %186 = vmatpush.msra.mxu0 %v109
    %187 = vmatpush.msra.mxu0 %v107
    %188 = vmatpush.msra.mxu0 %v105
    %189 = vmatpush.msra.mxu0 %v103
    %190 = vmatmul.f32.gmra.mxu0 %v101
    %v191 = vpop.f32.mrf.mxu0
    %v192 = vadd.f32 %v170, %v191
    %193 = vdwg.mxu0
    %194 = vmatpush.msra.mxu0 %v165
    %195 = vmatpush.msra.mxu0 %v163
    %196 = vmatpush.msra.mxu0 %v161
    %197 = vmatpush.msra.mxu0 %v159
    %198 = vmatpush.msra.mxu0 %v157
    %199 = vmatpush.msra.mxu0 %v155
    %200 = vmatpush.msra.mxu0 %v153
    %201 = vmatpush.msra.mxu0 %v151
    %202 = vmatpush.msra.mxu0 %v149
    %203 = vmatpush.msra.mxu0 %v147
    %204 = vmatpush.msra.mxu0 %v145
    %205 = vmatpush.msra.mxu0 %v143
    %206 = vmatpush.msra.mxu0 %v141
    %207 = vmatpush.msra.mxu0 %v139
    %208 = vmatpush.msra.mxu0 %v137
    %209 = vmatpush.msra.mxu0 %v135
    %210 = vmatmul.f32.gmra.mxu0 %v102
    %v211 = vpop.f32.mrf.mxu0
    %v212 = vadd.f32 %v192, %v211
    %213 = vdwg.mxu0
    %214 = vmatpush.msra.mxu0 %v134
    %215 = vmatpush.msra.mxu0 %v132
    %216 = vmatpush.msra.mxu0 %v130
    %217 = vmatpush.msra.mxu0 %v128
    %218 = vmatpush.msra.mxu0 %v126
    %219 = vmatpush.msra.mxu0 %v124
    %220 = vmatpush.msra.mxu0 %v122
    %221 = vmatpush.msra.mxu0 %v120
    %222 = vmatpush.msra.mxu0 %v118
    %223 = vmatpush.msra.mxu0 %v116
    %224 = vmatpush.msra.mxu0 %v114
    %225 = vmatpush.msra.mxu0 %v112
    %226 = vmatpush.msra.mxu0 %v110
    %227 = vmatpush.msra.mxu0 %v108
    %228 = vmatpush.msra.mxu0 %v106
    %229 = vmatpush.msra.mxu0 %v104
    %230 = vmatmul.f32.gmra.mxu0 %v101
    %v231 = vpop.f32.mrf.mxu0
    %v232 = vadd.f32 %v171, %v231
    %233 = vdwg.mxu0
    %234 = vmatpush.msra.mxu0 %v166
    %235 = vmatpush.msra.mxu0 %v164
    %236 = vmatpush.msra.mxu0 %v162
    %237 = vmatpush.msra.mxu0 %v160
    %238 = vmatpush.msra.mxu0 %v158
    %239 = vmatpush.msra.mxu0 %v156
    %240 = vmatpush.msra.mxu0 %v154
    %241 = vmatpush.msra.mxu0 %v152
    %242 = vmatpush.msra.mxu0 %v150
    %243 = vmatpush.msra.mxu0 %v148
    %244 = vmatpush.msra.mxu0 %v146
    %245 = vmatpush.msra.mxu0 %v144
    %246 = vmatpush.msra.mxu0 %v142
    %247 = vmatpush.msra.mxu0 %v140
    %248 = vmatpush.msra.mxu0 %v138
    %249 = vmatpush.msra.mxu0 %v136
    %250 = vmatmul.f32.gmra.mxu0 %v102
    %v251 = vpop.f32.mrf.mxu0
    %v252 = vadd.f32 %v232, %v251
    %253 = vdwg.mxu0
    %v254 = vmax.f32 %v212, 0.0
    %v255 = vmax.f32 %v252, 0.0
    %v256 = vld [vmem:[%s3] sm:$0xff]
    %v257 = vld [vmem:[%s3 + $0x8] sm:$0xff]
    %v258 = vld [vmem:[%s3 + $0x10] sm:$0xff]
    %v259 = vld [vmem:[%s3 + $0x18] sm:$0xff]
    %v260 = vld [vmem:[%s3 + $0x20] sm:$0xff]
    %v261 = vld [vmem:[%s3 + $0x28] sm:$0xff]
    %v262 = vld [vmem:[%s3 + $0x30] sm:$0xff]
    %v263 = vld [vmem:[%s3 + $0x38] sm:$0xff]
    %v264 = vld [vmem:[%s3 + $0x40] sm:$0xff]
    %v265 = vld [vmem:[%s3 + $0x48] sm:$0xff]
    %v266 = vld [vmem:[%s3 + $0x50] sm:$0xff]
    %v267 = vld [vmem:[%s3 + $0x58] sm:$0xff]
    %v268 = vld [vmem:[%s3 + $0x60] sm:$0xff]
    %v269 = vld [vmem:[%s3 + $0x68] sm:$0xff]
    %v270 = vld [vmem:[%s3 + $0x70] sm:$0xff]
    %v271 = vld [vmem:[%s3 + $0x78] sm:$0xff]
    %v272 = vld [vmem:[%s3 + $0x80] sm:$0xff]
    %v273 = vld [vmem:[%s3 + $0x88] sm:$0xff]
    %v274 = vld [vmem:[%s3 + $0x90] sm:$0xff]
    %v275 = vld [vmem:[%s3 + $0x98] sm:$0xff]
    %v276 = vld [vmem:[%s3 + $0xa0] sm:$0xff]
    %v277 = vld [vmem:[%s3 + $0xa8] sm:$0xff]
    %v278 = vld [vmem:[%s3 + $0xb0] sm:$0xff]
    %v279 = vld [vmem:[%s3 + $0xb8] sm:$0xff]
    %v280 = vld [vmem:[%s3 + $0xc0] sm:$0xff]
    %v281 = vld [vmem:[%s3 + $0xc8] sm:$0xff]
    %v282 = vld [vmem:[%s3 + $0xd0] sm:$0xff]
    %v283 = vld [vmem:[%s3 + $0xd8] sm:$0xff]
    %v284 = vld [vmem:[%s3 + $0xe0] sm:$0xff]
    %v285 = vld [vmem:[%s3 + $0xe8] sm:$0xff]
    %v286 = vld [vmem:[%s3 + $0xf0] sm:$0xff]
    %v287 = vld [vmem:[%s3 + $0xf8] sm:$0xff]
    %v288 = vld [vmem:[%s2 + $0x2] ss:$0 sm:$0xff]
    %289 = vmatpush.msra.mxu0 %v271
    %290 = vmatpush.msra.mxu0 %v270
    %291 = vmatpush.msra.mxu0 %v269
    %292 = vmatpush.msra.mxu0 %v268
    %293 = vmatpush.msra.mxu0 %v267
    %294 = vmatpush.msra.mxu0 %v266
    %295 = vmatpush.msra.mxu0 %v265
    %296 = vmatpush.msra.mxu0 %v264
    %297 = vmatpush.msra.mxu0 %v263
    %298 = vmatpush.msra.mxu0 %v262
    %299 = vmatpush.msra.mxu0 %v261
    %300 = vmatpush.msra.mxu0 %v260
    %301 = vmatpush.msra.mxu0 %v259
    %302 = vmatpush.msra.mxu0 %v258
    %303 = vmatpush.msra.mxu0 %v257
    %304 = vmatpush.msra.mxu0 %v256
    %305 = vmatmul.f32.gmra.mxu0 %v254
    %v306 = vpop.f32.mrf.mxu0
    %v307 = vadd.f32 %v288, %v306
    %308 = vdwg.mxu0
    %309 = vmatpush.msra.mxu0 %v287
    %310 = vmatpush.msra.mxu0 %v286
    %311 = vmatpush.msra.mxu0 %v285
    %312 = vmatpush.msra.mxu0 %v284
    %313 = vmatpush.msra.mxu0 %v283
    %314 = vmatpush.msra.mxu0 %v282
    %315 = vmatpush.msra.mxu0 %v281
    %316 = vmatpush.msra.mxu0 %v280
    %317 = vmatpush.msra.mxu0 %v279
    %318 = vmatpush.msra.mxu0 %v278
    %319 = vmatpush.msra.mxu0 %v277
    %320 = vmatpush.msra.mxu0 %v276
    %321 = vmatpush.msra.mxu0 %v275
    %322 = vmatpush.msra.mxu0 %v274
    %323 = vmatpush.msra.mxu0 %v273
    %324 = vmatpush.msra.mxu0 %v272
    %325 = vmatmul.f32.gmra.mxu0 %v255
    %v326 = vpop.f32.mrf.mxu0
    %v327 = vadd.f32 %v307, %v326
    %328 = vdwg.mxu0
    %vm329 = vcmask 91136
    %v330 = vsel %vm329, %v327, -inf
    %331 = vmax.xlane.f32.xlu0 %v330
    %v332 = vpop.xlane.xlu0 %331
    %v333 = vsub.f32 %v327, %v332
    %v334 = vmul.f32 %v333, 1.442695
    %v335 = vpow.pop %v334
    %v336 = vsel %vm329, %v335, 0.0
    %337 = vadd.xlane.f32.xlu0 %v336
    %v338 = vpop.xlane.xlu0 %337
    %v339 = vrcp.pop %v338
    %v340 = vmul.f32 %v338, %v339
    %v341 = vsub.f32 1.0, %v340
    %v342 = vmul.f32 %v339, %v341
    %v343 = vadd.f32 %v339, %v342
    %vm344 = vweird.f32 %v338
    %vm345 = vweird.f32 %v339
    %vm346 = vmor %vm344, %vm345
    %v347 = vsel %vm346, %v339, %v343
    %v348 = vand.u32 2147483647, %v338
    %vm349 = vcmp.eq.f32.partialorder %v348, 8.507059e+37
    %v350 = vand.u32 %v338, 2147483648
    %v351 = vor.u32 1.1754944e-38, %v350
    %v352 = vsel %vm349, %v351, %v347
    %v353 = vmul.f32 %v335, %v352
    %354 = vst.msk [vmem:[#allocation5] sm:$0x3] %vm329, %v353
    // Predicated region
    $region22: #{tpu_custom_call.1} parent=1 // pred_check
      _
    $region23: #{tpu_custom_call.1} parent=1 // pred_check_branch
      %356 = sbr.rel (0) target = $region25
    $region24: #{tpu_custom_call.1} parent=1 // pred_region
      %358 = vsyncadd [#allocation4], 0
      %s360 = sshll.u32 [#allocation5], 4
      %s361 = int_to_ptr.vmem [resolvable:$true] %s360
      %s362 = sshll.u32 %s4, 4
      %s363 = int_to_ptr.hbm [resolvable:$true] %s362
      %365 = dma.vmem_to_hbm [thread:$0]  %s361, 32, %s363, [#allocation4]
    $region25: #{tpu_custom_call.1} parent=1 // pred_fallthru
      _
    // Predicated region
    $region26: #{tpu_custom_call.1} parent=1 // pred_check
      _
    $region27: #{tpu_custom_call.1} parent=1 // pred_check_branch
      %367 = sbr.rel (0) target = $region29
    $region28: #{tpu_custom_call.1} parent=1 // pred_region
      %369 = dma.done [#allocation4], 32
    $region29: #{tpu_custom_call.1} parent=1 // pred_fallthru
      _
    %370 = vsyncpa [#allocation3], 1
    %371 = vsyncpa [#allocation4], 1

</llo_original>
